<compile_context>
chip_gen: v5e
topology: v5e:2x2
jax: 0.10.0
libtpu: 0.0.40
codegen_flags: <defaults>
</compile_context>

<pallas_src>
import jax
import jax.numpy as jnp
from jax.experimental import pallas as pl
from jax.experimental.pallas import tpu as pltpu


def linear_kernel(x_ref, w_ref, b_ref, o_ref):
    # x_ref/o_ref: (block_rows, width) lane-dense f32 tiles in VMEM.
    # w_ref: (1, 1) and b_ref: (1,) scalars in SMEM.
    w = w_ref[0, 0]
    b = b_ref[0]
    # Pure VPU: one fmul + fadd per vreg; kernel is HBM-bandwidth bound.
    o_ref[...] = x_ref[...] * w + b


def linear_forward(x, w, b, *, width=1024, max_block_rows=512):
    """y = x @ w.T + b for nn.Linear(1, 1) semantics. x: (N, 1), w: (1, 1), b: (1,)."""
    N, f_in = x.shape
    f_out, f_in_w = w.shape
    assert f_in == 1 and f_out == 1 and f_in_w == 1 and b.shape == (1,)
    assert width % 128 == 0 and max_block_rows % 8 == 0

    # --- Lane-dense repack: (N, 1) -> (rows, width), padded so rows % block_rows == 0. ---
    total = N
    rows_min = -(-total // width)                     # ceil(total / width)
    rows_min = max(8, -(-rows_min // 8) * 8)          # whole number of 8-sublane tiles
    block_rows = min(max_block_rows, rows_min)
    rows = -(-rows_min // block_rows) * block_rows    # whole number of grid blocks
    pad = rows * width - total

    x2d = jnp.pad(x.reshape(-1), (0, pad)).reshape(rows, width)

    grid = (rows // block_rows,)

    y2d = pl.pallas_call(
        linear_kernel,
        out_shape=jax.ShapeDtypeStruct((rows, width), x.dtype),
        grid_spec=pltpu.PrefetchScalarGridSpec(
            num_scalar_prefetch=0,
            grid=grid,
            in_specs=[
                pl.BlockSpec((block_rows, width), lambda i: (i, 0)),  # x tile (VMEM)
                pl.BlockSpec(memory_space=pltpu.SMEM),                # weight (1, 1)
                pl.BlockSpec(memory_space=pltpu.SMEM),                # bias (1,)
            ],
            out_specs=pl.BlockSpec((block_rows, width), lambda i: (i, 0)),
        ),
        compiler_params=pltpu.CompilerParams(
            dimension_semantics=("parallel",),        # shard grid steps across TCs on v7x
            vmem_limit_bytes=32 * 1024 * 1024,        # explicit, safe on v5e/v6e/v7x
        ),
    )(x2d, w, b)

    # --- Un-pack back to the original (N, 1) layout. ---
    return y2d.reshape(-1)[:N].reshape(N, f_out)


if __name__ == "__main__":
    key = jax.random.PRNGKey(0)
    kx, kw, kb, kx2 = jax.random.split(key, 4)

    # Deterministic parameters (nn.Linear(1, 1) shapes).
    w = jax.random.uniform(kw, (1, 1), dtype=jnp.float32, minval=-1.0, maxval=1.0)
    b = jax.random.uniform(kb, (1,), dtype=jnp.float32, minval=-1.0, maxval=1.0)

    # Case 1: small batch of scalar features, (batch=8, in_features=1).
    x = jax.random.normal(kx, (8, 1), dtype=jnp.float32)
    y = jax.block_until_ready(linear_forward(x, w, b))
    y_ref = x @ w.T + b
    assert y.shape == (8, 1)
    assert jnp.allclose(y, y_ref, atol=1e-6), "mismatch vs reference (N=8)"

    # Case 2: exercise the padded, multi-step tiled grid path with small tile params.
    x_big = jax.random.normal(kx2, (5000, 1), dtype=jnp.float32)
    y_big = jax.block_until_ready(
        linear_forward(x_big, w, b, width=128, max_block_rows=8)
    )
    y_big_ref = x_big @ w.T + b
    assert y_big.shape == (5000, 1)
    assert jnp.allclose(y_big, y_big_ref, atol=1e-6), "mismatch vs reference (N=5000)"

    print("KERNEL_OK")
</pallas_src>

<mosaic_0001>
module attributes {stable_mosaic.version = 11 : i64} {
  func.func @linear_kernel(%arg0: i32, %arg1: memref<8x1024xf32, #tpu.memory_space<vmem>>, %arg2: memref<1x1xf32, #tpu.memory_space<smem>>, %arg3: memref<1xf32, #tpu.memory_space<smem>>, %arg4: memref<8x1024xf32, #tpu.memory_space<vmem>>) attributes {dimension_semantics = [#tpu.dimension_semantics<parallel>], iteration_bounds = array<i64: 1>, scalar_prefetch = 0 : i64, scratch_operands = 0 : i64, tpu.core_type = #tpu.core_type<tc>, window_params = [{transform_indices = @transform_0, window_bounds = array<i64: 8, 1024>}, {transform_indices = @transform_1, window_bounds = array<i64: 1, 1>}, {transform_indices = @transform_2, window_bounds = array<i64: 1>}, {transform_indices = @transform_3, window_bounds = array<i64: 8, 1024>}]} {
    %c0 = arith.constant 0 : index
    %c0_0 = arith.constant 0 : index
    %0 = memref.load %arg2[%c0, %c0_0] : memref<1x1xf32, #tpu.memory_space<smem>>
    %c0_1 = arith.constant 0 : index
    %1 = memref.load %arg3[%c0_1] : memref<1xf32, #tpu.memory_space<smem>>
    %c0_2 = arith.constant 0 : index
    %c0_3 = arith.constant 0 : index
    %2 = vector.load %arg1[%c0_2, %c0_3] : memref<8x1024xf32, #tpu.memory_space<vmem>>, vector<8x1024xf32>
    %3 = vector.broadcast %0 : f32 to vector<8x1024xf32>
    %4 = arith.mulf %2, %3 : vector<8x1024xf32>
    %5 = vector.broadcast %1 : f32 to vector<8x1024xf32>
    %6 = arith.addf %4, %5 : vector<8x1024xf32>
    %c0_4 = arith.constant 0 : index
    %c0_5 = arith.constant 0 : index
    %7 = vector.load %arg4[%c0_4, %c0_5] : memref<8x1024xf32, #tpu.memory_space<vmem>>, vector<8x1024xf32>
    tpu.vector_store %arg4[%c0_4, %c0_5], %6 {strides = array<i32>} : memref<8x1024xf32, #tpu.memory_space<vmem>>, vector<8x1024xf32>,
    return
  }
  func.func @transform_0(%arg0: i32) -> (i32, i32) {
    %c0_i32 = arith.constant 0 : i32
    %c0_i32_0 = arith.constant 0 : i32
    return %arg0, %c0_i32 : i32, i32
  }
  func.func @transform_1(%arg0: i32) -> (i32, i32) {
    %c0_i32 = arith.constant 0 : i32
    %c0_i32_0 = arith.constant 0 : i32
    %c0_i32_1 = arith.constant 0 : i32
    return %c0_i32, %c0_i32_0 : i32, i32
  }
  func.func @transform_2(%arg0: i32) -> i32 {
    %c0_i32 = arith.constant 0 : i32
    %c0_i32_0 = arith.constant 0 : i32
    return %c0_i32 : i32
  }
  func.func @transform_3(%arg0: i32) -> (i32, i32) {
    %c0_i32 = arith.constant 0 : i32
    %c0_i32_0 = arith.constant 0 : i32
    return %arg0, %c0_i32 : i32, i32
  }
}

</mosaic_0001>

<llo_original>
// kernel: tpu_custom_call.1
$region0: #{tpu_custom_call.1}
  #allocation0 [shape = 'u32[]', space=smem, size = 0x4, offset = 0x4, fixed_abs, tag = 'smem constant byte address 0x4 - core index']
  #allocation1 [shape = 'u32[72,128]{1,0:T(1,128)}', space=vmem, size = 0x9000, scoped, tag = 'internal scratch']
  #allocation2 [shape = 'f32[1,1]{1,0:T(1,128)S(6)}', space=smem, size = 0x200, scoped, tag = 'scoped memory for tpu_custom_call.1']
  #allocation3 [shape = 'f32[1]{0:T(128)S(6)}', space=smem, size = 0x200, scoped, tag = 'scoped memory for tpu_custom_call.1']
  %s0 = inlined_call_operand.hbm [shape: f32[8,1024], index: 0, kind: input, shape index: {}]
  %s1 = inlined_call_operand.<no memory space> [shape: f32[1,1], index: 1, kind: input, shape index: {}]
  %s2 = inlined_call_operand.<no memory space> [shape: f32[1], index: 2, kind: input, shape index: {}]
  %s3 = inlined_call_operand.hbm [shape: f32[8,1024], index: 3, kind: output, shape index: {}]
  %s4 = sld [smem:[#allocation0]]
  $region26: #{tpu_custom_call.1} parent=0
    _
  %s6 = ssub.s32 1, %s4
  %s7 = scalar_select 0, %s6, %s4
  %8 = sst [smem:[#allocation2]] %s1
  %9 = sst [smem:[#allocation3]] %s2
  $region1: #{tpu_custom_call.1} parent=0
    #allocation4 [shape = 'u8[32768]{0}', space=vmem, size = 0x8000, scoped, tag = 'input window, operand 0, single buffered']
    #allocation5 [shape = 's32[1]{0}', space=sflag, size = 0x4, scoped, tag = 'scoped memory for tpu_custom_call.1']
    #allocation6 [shape = 's32[1]{0}', space=sflag, size = 0x4, scoped, tag = 'scoped memory for tpu_custom_call.1']
    #allocation7 [shape = 'u8[32768]{0}', space=vmem, size = 0x8000, scoped, tag = 'output window, operand 0, single buffered']
    %10 = vsyncpa [#allocation5], 0
    %11 = vsyncpa [#allocation6], 0
    // Predicated region
    $region2: #{tpu_custom_call.1} parent=1 // pred_check
      _
    $region3: #{tpu_custom_call.1} parent=1 // pred_check_branch
      %13 = sbr.rel (0) target = $region5
    $region4: #{tpu_custom_call.1} parent=1 // pred_region
      %15 = vsyncadd [#allocation5], 0
      %s17 = sshll.u32 %s0, 4
      %s18 = int_to_ptr.hbm [resolvable:$true] %s17
      %s19 = sshll.u32 [#allocation4], 4
      %s20 = int_to_ptr.vmem [resolvable:$true] %s19
      %22 = dma.hbm_to_vmem [thread:$0]  %s18, 1024, %s20, [#allocation5]
    $region5: #{tpu_custom_call.1} parent=1 // pred_fallthru
      _
    // Predicated region
    $region6: #{tpu_custom_call.1} parent=1 // pred_check
      _
    $region7: #{tpu_custom_call.1} parent=1 // pred_check_branch
      %24 = sbr.rel (0) target = $region9
    $region8: #{tpu_custom_call.1} parent=1 // pred_region
      _
    $region9: #{tpu_custom_call.1} parent=1 // pred_fallthru
      _
    // Predicated region
    $region10: #{tpu_custom_call.1} parent=1 // pred_check
      _
    $region11: #{tpu_custom_call.1} parent=1 // pred_check_branch
      %26 = sbr.rel (0) target = $region13
    $region12: #{tpu_custom_call.1} parent=1 // pred_region
      _
    $region13: #{tpu_custom_call.1} parent=1 // pred_fallthru
      _
    // Predicated region
    $region14: #{tpu_custom_call.1} parent=1 // pred_check
      _
    $region15: #{tpu_custom_call.1} parent=1 // pred_check_branch
      %28 = sbr.rel (0) target = $region17
    $region16: #{tpu_custom_call.1} parent=1 // pred_region
      %30 = dma.done [#allocation5], 1024
    $region17: #{tpu_custom_call.1} parent=1 // pred_fallthru
      _
    %s31 = sld [smem:[#allocation2]]
    %s32 = sld [smem:[#allocation3]]
    %v33 = vld [vmem:[#allocation4] sm:$0xff]
    %v34 = vld [vmem:[#allocation4 + $0x8] sm:$0xff]
    %v35 = vld [vmem:[#allocation4 + $0x10] sm:$0xff]
    %v36 = vld [vmem:[#allocation4 + $0x18] sm:$0xff]
    %v37 = vld [vmem:[#allocation4 + $0x20] sm:$0xff]
    %v38 = vld [vmem:[#allocation4 + $0x28] sm:$0xff]
    %v39 = vld [vmem:[#allocation4 + $0x30] sm:$0xff]
    %v40 = vld [vmem:[#allocation4 + $0x38] sm:$0xff]
    %v41 = vstv %s31
    %v42 = vmul.f32 %v33, %v41
    %v43 = vmul.f32 %v34, %v41
    %v44 = vmul.f32 %v35, %v41
    %v45 = vmul.f32 %v36, %v41
    %v46 = vmul.f32 %v37, %v41
    %v47 = vmul.f32 %v38, %v41
    %v48 = vmul.f32 %v39, %v41
    %v49 = vmul.f32 %v40, %v41
    %v50 = vstv %s32
    %v51 = vadd.f32 %v42, %v50
    %v52 = vadd.f32 %v43, %v50
    %v53 = vadd.f32 %v44, %v50
    %v54 = vadd.f32 %v45, %v50
    %v55 = vadd.f32 %v46, %v50
    %v56 = vadd.f32 %v47, %v50
    %v57 = vadd.f32 %v48, %v50
    %v58 = vadd.f32 %v49, %v50
    %59 = vst [vmem:[#allocation7] sm:$0xff] %v51
    %60 = vst [vmem:[#allocation7 + $0x8] sm:$0xff] %v52
    %61 = vst [vmem:[#allocation7 + $0x10] sm:$0xff] %v53
    %62 = vst [vmem:[#allocation7 + $0x18] sm:$0xff] %v54
    %63 = vst [vmem:[#allocation7 + $0x20] sm:$0xff] %v55
    %64 = vst [vmem:[#allocation7 + $0x28] sm:$0xff] %v56
    %65 = vst [vmem:[#allocation7 + $0x30] sm:$0xff] %v57
    %66 = vst [vmem:[#allocation7 + $0x38] sm:$0xff] %v58
    // Predicated region
    $region18: #{tpu_custom_call.1} parent=1 // pred_check
      _
    $region19: #{tpu_custom_call.1} parent=1 // pred_check_branch
      %68 = sbr.rel (0) target = $region21
    $region20: #{tpu_custom_call.1} parent=1 // pred_region
      %70 = vsyncadd [#allocation6], 0
      %s72 = sshll.u32 [#allocation7], 4
      %s73 = int_to_ptr.vmem [resolvable:$true] %s72
      %s74 = sshll.u32 %s3, 4
      %s75 = int_to_ptr.hbm [resolvable:$true] %s74
      %77 = dma.vmem_to_hbm [thread:$0]  %s73, 1024, %s75, [#allocation6]
    $region21: #{tpu_custom_call.1} parent=1 // pred_fallthru
      _
    // Predicated region
    $region22: #{tpu_custom_call.1} parent=1 // pred_check
      _
    $region23: #{tpu_custom_call.1} parent=1 // pred_check_branch
      %79 = sbr.rel (0) target = $region25
    $region24: #{tpu_custom_call.1} parent=1 // pred_region
      %81 = dma.done [#allocation6], 1024
    $region25: #{tpu_custom_call.1} parent=1 // pred_fallthru
      _
    %82 = vsyncpa [#allocation5], 1
    %83 = vsyncpa [#allocation6], 1

</llo_original>
